<compile_context>
chip_gen: v5e
topology: v5e:2x2
jax: 0.10.0
libtpu: 0.0.40
codegen_flags: <defaults>
</compile_context>

<pallas_src>
import jax
import jax.numpy as jnp
from jax.experimental import pallas as pl
from jax.experimental.pallas import tpu as pltpu

# ---------------- config (small synthetic shapes) ----------------
B = 2                      # videos per batch
N_SEG = 4                  # config.data.num_segments
BT = B * N_SEG             # frames per batch (image.size(0)) = 8
C, H, W = 3, 16, 16
D_IN = C * H * W           # flattened frame = 768
N_EMB = 32                 # config.network.n_emb
N_CLASSES = 10             # config.data.num_classes
DROP_FC = 0.5              # config.network.drop_fc (eval mode -> identity)

# Lane-dense padded widths (multiples of 128); pad values are zero so the
# logical results are unchanged.  The wrapper slices the classifier back.
N_EMB_PAD = ((N_EMB + 127) // 128) * 128        # 128
N_OUT = ((N_CLASSES + 127) // 128) * 128        # 128

# ---------------- tiling ----------------
# Single M tile at these toy shapes (grid = (1,)): the whole (8,768) x
# (768,128) visual matmul fits VMEM trivially.  At real CLIP sizes grow TM to
# a multiple of 8*N_SEG (e.g. 128-512) and keep bt//TM >= 2 so the "parallel"
# axis can shard across v7x's two TensorCores; reintroduce K tiling (TK=512+)
# only when the weight stream no longer fits.
TM = BT                    # 8
N_VID_TILE = TM // N_SEG   # videos per M tile (== B here)


def videoclip_kernel(x_ref, wv_ref, bv_ref, wf_ref, bf_ref, o_ref, emb_ref):
    """Fused: visual linear -> segment-mean fusion -> (eval dropout) -> fc."""
    # visual encoder (linear): cast activations to bf16 in-kernel, bf16 MXU
    # matmul with f32 accumulation; result lands in a small VMEM scratch so
    # the segment mean can use hardware strided sublane loads.
    x = x_ref[...].astype(jnp.bfloat16)                          # (TM, D_IN)
    emb_ref[...] = jnp.dot(x, wv_ref[...],
                           preferred_element_type=jnp.float32)   # (TM, N_EMB_PAD) f32

    # fusion_model ("meanP"): mean over the N_SEG frames of each video, as a
    # vectorized strided reduction (rows s, s+N_SEG, ... belong to frame s of
    # each video).  No per-video unroll, no masked stores.
    pooled = emb_ref[pl.ds(0, N_VID_TILE, stride=N_SEG), :]
    for s in range(1, N_SEG):
        pooled = pooled + emb_ref[pl.ds(s, N_VID_TILE, stride=N_SEG), :]
    # visual bias commutes with the mean -> add once per video.
    pooled = pooled * (1.0 / N_SEG) + bv_ref[...]                # (N_VID_TILE, N_EMB_PAD)

    # drop_out: eval-mode nn.Dropout is the identity.
    # fc classifier: f32 MXU pass (matches the PyTorch f32 nn.Linear),
    # lane-dense padded output slab.
    logit = jnp.dot(pooled, wf_ref[...],
                    preferred_element_type=jnp.float32)          # (N_VID_TILE, N_OUT)
    o_ref[...] = (logit + bf_ref[...]).astype(o_ref.dtype)


def prepare_params(w_vis, b_vis, w_fc, b_fc):
    """One-time parameter prep (hoisted out of the forward path):
    pad to lane-dense widths and cast MXU weights to bf16."""
    wv = jnp.pad(w_vis, ((0, 0), (0, N_EMB_PAD - N_EMB))).astype(jnp.bfloat16)
    bv = jnp.pad(b_vis, (0, N_EMB_PAD - N_EMB)).reshape(1, N_EMB_PAD).astype(jnp.float32)
    wf = jnp.pad(w_fc, ((0, N_EMB_PAD - N_EMB),
                        (0, N_OUT - N_CLASSES))).astype(jnp.float32)
    bf = jnp.pad(b_fc, (0, N_OUT - N_CLASSES)).reshape(1, N_OUT).astype(jnp.float32)
    return wv, bv, wf, bf


def videoclip_forward(image, wv, bv, wf, bf):
    """image: (BT, C, H, W) float32 (NCHW like PyTorch); wv/bv/wf/bf from
    prepare_params (already padded / cast)."""
    bt = image.shape[0]
    assert bt % N_SEG == 0 and bt % TM == 0
    n_vid = bt // N_SEG
    x = image.reshape(bt, -1)                                    # (BT, D_IN) f32; bf16 cast in-kernel

    grid = (bt // TM,)                                           # (1,) at toy shapes

    cost = pl.CostEstimate(
        flops=2 * bt * D_IN * N_EMB_PAD + 2 * n_vid * N_EMB_PAD * N_OUT,
        transcendentals=0,
        bytes_accessed=(x.size * 4 + wv.size * 2 + wf.size * 4
                        + bv.size * 4 + bf.size * 4 + n_vid * N_OUT * 4))

    out = pl.pallas_call(
        videoclip_kernel,
        out_shape=jax.ShapeDtypeStruct((n_vid, N_OUT), jnp.float32),
        grid_spec=pltpu.PrefetchScalarGridSpec(
            num_scalar_prefetch=0,
            grid=grid,
            in_specs=[
                pl.BlockSpec((TM, D_IN), lambda i: (i, 0)),            # x (f32)
                pl.BlockSpec((D_IN, N_EMB_PAD), lambda i: (0, 0)),     # w_vis (bf16, padded)
                pl.BlockSpec((1, N_EMB_PAD), lambda i: (0, 0)),        # b_vis (padded)
                pl.BlockSpec((N_EMB_PAD, N_OUT), lambda i: (0, 0)),    # w_fc (f32, padded)
                pl.BlockSpec((1, N_OUT), lambda i: (0, 0)),            # b_fc (padded)
            ],
            out_specs=pl.BlockSpec((N_VID_TILE, N_OUT), lambda i: (i, 0)),
            scratch_shapes=[
                pltpu.VMEM((TM, N_EMB_PAD), jnp.float32),              # frame embeddings
            ],
        ),
        compiler_params=pltpu.CompilerParams(
            dimension_semantics=("parallel",)),
        cost_estimate=cost,
    )(x, wv, bv, wf, bf)
    return out[:, :N_CLASSES]


if __name__ == "__main__":
    key = jax.random.PRNGKey(0)
    k_img, k_wv, k_bv, k_wf, k_bf = jax.random.split(key, 5)

    image = jax.random.normal(k_img, (BT, C, H, W), dtype=jnp.float32)
    # deterministic synthetic parameters
    w_vis = jax.random.normal(k_wv, (D_IN, N_EMB), dtype=jnp.float32) * 0.02
    b_vis = jax.random.normal(k_bv, (N_EMB,), dtype=jnp.float32) * 0.02
    w_fc = jax.random.normal(k_wf, (N_EMB, N_CLASSES), dtype=jnp.float32) * 0.02
    b_fc = jax.random.normal(k_bf, (N_CLASSES,), dtype=jnp.float32) * 0.02

    # One-time weight prep (hoisted out of the per-call forward path).
    wv, bv, wf, bf = prepare_params(w_vis, b_vis, w_fc, b_fc)
    wv, bv, wf, bf = jax.block_until_ready((wv, bv, wf, bf))

    logits = videoclip_forward(image, wv, bv, wf, bf)
    logits = jax.block_until_ready(logits)

    # Reference in plain JAX mirroring the kernel's bf16 visual-matmul operands
    # (products of bf16 values are exact in f32; only accumulation order
    # differs).  The fc is f32, like the PyTorch nn.Linear.
    xb = image.reshape(BT, -1).astype(jnp.bfloat16).astype(jnp.float32)
    wvb = w_vis.astype(jnp.bfloat16).astype(jnp.float32)
    emb_ref = xb @ wvb                                              # (BT, N_EMB)
    pooled_ref = emb_ref.reshape(B, N_SEG, N_EMB).mean(axis=1) + b_vis
    logits_ref = pooled_ref @ w_fc + b_fc

    assert logits.shape == (B, N_CLASSES)
    assert jnp.allclose(logits, logits_ref, atol=1e-3, rtol=1e-3), (
        float(jnp.max(jnp.abs(logits - logits_ref))))

    print("KERNEL_OK")
</pallas_src>

<mosaic_0001>
module attributes {stable_mosaic.version = 11 : i64} {
  func.func @videoclip_kernel(%arg0: i32, %arg1: memref<8x768xf32, #tpu.memory_space<vmem>>, %arg2: memref<768x128xbf16, #tpu.memory_space<vmem>>, %arg3: memref<1x128xf32, #tpu.memory_space<vmem>>, %arg4: memref<128x128xf32, #tpu.memory_space<vmem>>, %arg5: memref<1x128xf32, #tpu.memory_space<vmem>>, %arg6: memref<2x128xf32, #tpu.memory_space<vmem>>, %arg7: memref<8x128xf32, #tpu.memory_space<vmem>>) attributes {dimension_semantics = [#tpu.dimension_semantics<parallel>], iteration_bounds = array<i64: 1>, scalar_prefetch = 0 : i64, scratch_operands = 1 : i64, tpu.core_type = #tpu.core_type<tc>, window_params = [{transform_indices = @transform_0, window_bounds = array<i64: 8, 768>}, {pipeline_mode = #tpu.pipeline_mode<synchronous>, transform_indices = @transform_1, window_bounds = array<i64: 768, 128>}, {pipeline_mode = #tpu.pipeline_mode<synchronous>, transform_indices = @transform_2, window_bounds = array<i64: 1, 128>}, {pipeline_mode = #tpu.pipeline_mode<synchronous>, transform_indices = @transform_3, window_bounds = array<i64: 128, 128>}, {pipeline_mode = #tpu.pipeline_mode<synchronous>, transform_indices = @transform_4, window_bounds = array<i64: 1, 128>}, {transform_indices = @transform_5, window_bounds = array<i64: 2, 128>}]} {
    %c0 = arith.constant 0 : index
    %c0_0 = arith.constant 0 : index
    %0 = vector.load %arg1[%c0, %c0_0] : memref<8x768xf32, #tpu.memory_space<vmem>>, vector<8x768xf32>
    %1 = arith.truncf %0 : vector<8x768xf32> to vector<8x768xbf16>
    %c0_1 = arith.constant 0 : index
    %c0_2 = arith.constant 0 : index
    %2 = vector.load %arg2[%c0_1, %c0_2] : memref<768x128xbf16, #tpu.memory_space<vmem>>, vector<768x128xbf16>
    %cst = arith.constant dense<0.000000e+00> : vector<8x128xf32>
    %3 = tpu.matmul %1, %2, %cst {dimension_numbers = #tpu.dot_dimension_numbers<[1], [0], [0], [1], [0, 0, 1, 1], [], []>} : vector<8x768xbf16>, vector<768x128xbf16>, vector<8x128xf32> -> vector<8x128xf32>
    %c0_3 = arith.constant 0 : index
    %c0_4 = arith.constant 0 : index
    %4 = vector.load %arg7[%c0_3, %c0_4] : memref<8x128xf32, #tpu.memory_space<vmem>>, vector<8x128xf32>
    tpu.vector_store %arg7[%c0_3, %c0_4], %3 {strides = array<i32>} : memref<8x128xf32, #tpu.memory_space<vmem>>, vector<8x128xf32>,
    %c0_5 = arith.constant 0 : index
    %c0_6 = arith.constant 0 : index
    %5 = tpu.strided_load %arg7[%c0_5, %c0_6] {strides = array<i32: 4, 1>} : memref<8x128xf32, #tpu.memory_space<vmem>>, vector<2x128xf32>
    %c1 = arith.constant 1 : index
    %c0_7 = arith.constant 0 : index
    %6 = tpu.strided_load %arg7[%c1, %c0_7] {strides = array<i32: 4, 1>} : memref<8x128xf32, #tpu.memory_space<vmem>>, vector<2x128xf32>
    %7 = arith.addf %5, %6 : vector<2x128xf32>
    %c2 = arith.constant 2 : index
    %c0_8 = arith.constant 0 : index
    %8 = tpu.strided_load %arg7[%c2, %c0_8] {strides = array<i32: 4, 1>} : memref<8x128xf32, #tpu.memory_space<vmem>>, vector<2x128xf32>
    %9 = arith.addf %7, %8 : vector<2x128xf32>
    %c3 = arith.constant 3 : index
    %c0_9 = arith.constant 0 : index
    %10 = tpu.strided_load %arg7[%c3, %c0_9] {strides = array<i32: 4, 1>} : memref<8x128xf32, #tpu.memory_space<vmem>>, vector<2x128xf32>
    %11 = arith.addf %9, %10 : vector<2x128xf32>
    %cst_10 = arith.constant 2.500000e-01 : f32
    %12 = vector.broadcast %cst_10 : f32 to vector<2x128xf32>
    %13 = arith.mulf %11, %12 : vector<2x128xf32>
    %c0_11 = arith.constant 0 : index
    %c0_12 = arith.constant 0 : index
    %14 = vector.load %arg3[%c0_11, %c0_12] : memref<1x128xf32, #tpu.memory_space<vmem>>, vector<1x128xf32>
    %15 = vector.broadcast %14 : vector<1x128xf32> to vector<2x128xf32>
    %16 = arith.addf %13, %15 : vector<2x128xf32>
    %c0_13 = arith.constant 0 : index
    %c0_14 = arith.constant 0 : index
    %17 = vector.load %arg4[%c0_13, %c0_14] : memref<128x128xf32, #tpu.memory_space<vmem>>, vector<128x128xf32>
    %cst_15 = arith.constant dense<0.000000e+00> : vector<2x128xf32>
    %18 = tpu.matmul %16, %17, %cst_15 {dimension_numbers = #tpu.dot_dimension_numbers<[1], [0], [0], [1], [0, 0, 1, 1], [], []>} : vector<2x128xf32>, vector<128x128xf32>, vector<2x128xf32> -> vector<2x128xf32>
    %c0_16 = arith.constant 0 : index
    %c0_17 = arith.constant 0 : index
    %19 = vector.load %arg5[%c0_16, %c0_17] : memref<1x128xf32, #tpu.memory_space<vmem>>, vector<1x128xf32>
    %20 = vector.broadcast %19 : vector<1x128xf32> to vector<2x128xf32>
    %21 = arith.addf %18, %20 : vector<2x128xf32>
    %c0_18 = arith.constant 0 : index
    %c0_19 = arith.constant 0 : index
    %22 = vector.load %arg6[%c0_18, %c0_19] : memref<2x128xf32, #tpu.memory_space<vmem>>, vector<2x128xf32>
    tpu.vector_store %arg6[%c0_18, %c0_19], %21 {strides = array<i32>} : memref<2x128xf32, #tpu.memory_space<vmem>>, vector<2x128xf32>,
    return
  }
  func.func @transform_0(%arg0: i32) -> (i32, i32) {
    %c0_i32 = arith.constant 0 : i32
    %c0_i32_0 = arith.constant 0 : i32
    return %arg0, %c0_i32 : i32, i32
  }
  func.func @transform_1(%arg0: i32) -> (i32, i32) {
    %c0_i32 = arith.constant 0 : i32
    %c0_i32_0 = arith.constant 0 : i32
    %c0_i32_1 = arith.constant 0 : i32
    return %c0_i32, %c0_i32_0 : i32, i32
  }
  func.func @transform_2(%arg0: i32) -> (i32, i32) {
    %c0_i32 = arith.constant 0 : i32
    %c0_i32_0 = arith.constant 0 : i32
    %c0_i32_1 = arith.constant 0 : i32
    return %c0_i32, %c0_i32_0 : i32, i32
  }
  func.func @transform_3(%arg0: i32) -> (i32, i32) {
    %c0_i32 = arith.constant 0 : i32
    %c0_i32_0 = arith.constant 0 : i32
    %c0_i32_1 = arith.constant 0 : i32
    return %c0_i32, %c0_i32_0 : i32, i32
  }
  func.func @transform_4(%arg0: i32) -> (i32, i32) {
    %c0_i32 = arith.constant 0 : i32
    %c0_i32_0 = arith.constant 0 : i32
    %c0_i32_1 = arith.constant 0 : i32
    return %c0_i32, %c0_i32_0 : i32, i32
  }
  func.func @transform_5(%arg0: i32) -> (i32, i32) {
    %c0_i32 = arith.constant 0 : i32
    %c0_i32_0 = arith.constant 0 : i32
    return %arg0, %c0_i32 : i32, i32
  }
}

</mosaic_0001>

<llo_original>
// kernel: tpu_custom_call.1
$region0: #{tpu_custom_call.1}
  #allocation0 [shape = 'u32[]', space=smem, size = 0x4, offset = 0x4, fixed_abs, tag = 'smem constant byte address 0x4 - core index']
  #allocation1 [shape = 'u32[72,128]{1,0:T(1,128)}', space=vmem, size = 0x9000, scoped, tag = 'internal scratch']
  #allocation2 [shape = 'f32[8,128]{1,0:T(8,128)}', space=vmem, size = 0x1000, scoped, tag = 'scratch operand']
  %s0 = inlined_call_operand.hbm [shape: f32[8,768], index: 0, kind: input, shape index: {}]
  %s1 = inlined_call_operand.hbm [shape: bf16[768,128], index: 1, kind: input, shape index: {}]
  %s2 = inlined_call_operand.vmem [shape: f32[1,128], index: 2, kind: input, shape index: {}]
  %s3 = inlined_call_operand.hbm [shape: f32[128,128], index: 3, kind: input, shape index: {}]
  %s4 = inlined_call_operand.vmem [shape: f32[1,128], index: 4, kind: input, shape index: {}]
  %s5 = inlined_call_operand.hbm [shape: f32[2,128], index: 5, kind: output, shape index: {}]
  %s6 = sld [smem:[#allocation0]]
  $region42: #{tpu_custom_call.1} parent=0
    _
  %s8 = ssub.s32 1, %s6
  %s9 = scalar_select 0, %s8, %s6
  $region1: #{tpu_custom_call.1} parent=0
    #allocation3 [shape = 'u8[24576]{0}', space=vmem, size = 0x6000, scoped, tag = 'input window, operand 0, single buffered']
    #allocation4 [shape = 's32[1]{0}', space=sflag, size = 0x4, scoped, tag = 'scoped memory for tpu_custom_call.1']
    #allocation5 [shape = 's32[1]{0}', space=sflag, size = 0x4, scoped, tag = 'scoped memory for tpu_custom_call.1']
    #allocation6 [shape = 'u8[196608]{0}', space=vmem, size = 0x30000, scoped, tag = 'input window, operand 1, single buffered']
    #allocation7 [shape = 's32[1]{0}', space=sflag, size = 0x4, scoped, tag = 'scoped memory for tpu_custom_call.1']
    #allocation8 [shape = 'u8[65536]{0}', space=vmem, size = 0x10000, scoped, tag = 'input window, operand 3, single buffered']
    #allocation9 [shape = 'u8[1024]{0}', space=vmem, size = 0x400, scoped, tag = 'output window, operand 0, single buffered']
    %10 = vsyncpa [#allocation4], 0
    %11 = vsyncpa [#allocation7], 0
    %12 = vsyncpa [#allocation5], 0
    // Predicated region
    $region2: #{tpu_custom_call.1} parent=1 // pred_check
      _
    $region3: #{tpu_custom_call.1} parent=1 // pred_check_branch
      %14 = sbr.rel (0) target = $region5
    $region4: #{tpu_custom_call.1} parent=1 // pred_region
      %16 = vsyncadd [#allocation4], 0
      %s18 = sshll.u32 %s0, 4
      %s19 = int_to_ptr.hbm [resolvable:$true] %s18
      %s20 = sshll.u32 [#allocation3], 4
      %s21 = int_to_ptr.vmem [resolvable:$true] %s20
      %23 = dma.hbm_to_vmem [thread:$0]  %s19, 768, %s21, [#allocation4]
    $region5: #{tpu_custom_call.1} parent=1 // pred_fallthru
      _
    // Predicated region
    $region6: #{tpu_custom_call.1} parent=1 // pred_check
      _
    $region7: #{tpu_custom_call.1} parent=1 // pred_check_branch
      %25 = sbr.rel (0) target = $region9
    $region8: #{tpu_custom_call.1} parent=1 // pred_region
      %27 = vsyncadd [#allocation7], 0
      %s28 = sshll.u32 %s1, 4
      %s29 = int_to_ptr.hbm [resolvable:$true] %s28
      %s30 = sshll.u32 [#allocation6], 4
      %s31 = int_to_ptr.vmem [resolvable:$true] %s30
      %36 = dma.hbm_to_vmem [thread:$0]  %s29, 6144, %s31, [#allocation7], 64, 64, 4
    $region9: #{tpu_custom_call.1} parent=1 // pred_fallthru
      _
    // Predicated region
    $region10: #{tpu_custom_call.1} parent=1 // pred_check
      _
    $region11: #{tpu_custom_call.1} parent=1 // pred_check_branch
      %38 = sbr.rel (0) target = $region13
    $region12: #{tpu_custom_call.1} parent=1 // pred_region
      _
    $region13: #{tpu_custom_call.1} parent=1 // pred_fallthru
      _
    // Predicated region
    $region14: #{tpu_custom_call.1} parent=1 // pred_check
      _
    $region15: #{tpu_custom_call.1} parent=1 // pred_check_branch
      %40 = sbr.rel (0) target = $region17
    $region16: #{tpu_custom_call.1} parent=1 // pred_region
      %42 = vsyncadd [#allocation7], 0
      %s43 = sshll.u32 %s3, 4
      %s44 = int_to_ptr.hbm [resolvable:$true] %s43
      %s45 = sshll.u32 [#allocation8], 4
      %s46 = int_to_ptr.vmem [resolvable:$true] %s45
      %51 = dma.hbm_to_vmem [thread:$0]  %s44, 2048, %s46, [#allocation7], 128, 128, 8
    $region17: #{tpu_custom_call.1} parent=1 // pred_fallthru
      _
    // Predicated region
    $region18: #{tpu_custom_call.1} parent=1 // pred_check
      _
    $region19: #{tpu_custom_call.1} parent=1 // pred_check_branch
      %53 = sbr.rel (0) target = $region21
    $region20: #{tpu_custom_call.1} parent=1 // pred_region
      _
    $region21: #{tpu_custom_call.1} parent=1 // pred_fallthru
      _
    // Predicated region
    $region22: #{tpu_custom_call.1} parent=1 // pred_check
      _
    $region23: #{tpu_custom_call.1} parent=1 // pred_check_branch
      %55 = sbr.rel (0) target = $region25
    $region24: #{tpu_custom_call.1} parent=1 // pred_region
      %57 = dma.done [#allocation4], 768
    $region25: #{tpu_custom_call.1} parent=1 // pred_fallthru
      _
    // Predicated region
    $region26: #{tpu_custom_call.1} parent=1 // pred_check
      _
    $region27: #{tpu_custom_call.1} parent=1 // pred_check_branch
      %59 = sbr.rel (0) target = $region29
    $region28: #{tpu_custom_call.1} parent=1 // pred_region
      %61 = dma.done [#allocation7], 6144
    $region29: #{tpu_custom_call.1} parent=1 // pred_fallthru
      _
    // Predicated region
    $region30: #{tpu_custom_call.1} parent=1 // pred_check
      _
    $region31: #{tpu_custom_call.1} parent=1 // pred_check_branch
      %63 = sbr.rel (0) target = $region33
    $region32: #{tpu_custom_call.1} parent=1 // pred_region
      %65 = dma.done [#allocation7], 2048
    $region33: #{tpu_custom_call.1} parent=1 // pred_fallthru
      _
    %v66 = vld [vmem:[#allocation3] sm:$0xff]
    %v67 = vld [vmem:[#allocation3 + $0x8] sm:$0xff]
    %v68 = vld [vmem:[#allocation3 + $0x10] sm:$0xff]
    %v69 = vld [vmem:[#allocation3 + $0x18] sm:$0xff]
    %v70 = vld [vmem:[#allocation3 + $0x20] sm:$0xff]
    %v71 = vld [vmem:[#allocation3 + $0x28] sm:$0xff]
    %v72 = vpack.c.bf16 %v66, %v66
    %v73 = vpack.c.bf16 %v67, %v67
    %v74 = vpack.c.bf16 %v68, %v68
    %v75 = vpack.c.bf16 %v69, %v69
    %v76 = vpack.c.bf16 %v70, %v70
    %v77 = vpack.c.bf16 %v71, %v71
    %v78 = vld [vmem:[#allocation6] sm:$0xf]
    %v79 = vld [vmem:[#allocation6 + $0x4] sm:$0xf]
    %v80 = vld [vmem:[#allocation6 + $0x8] sm:$0xf]
    %v81 = vld [vmem:[#allocation6 + $0xc] sm:$0xf]
    %v82 = vld [vmem:[#allocation6 + $0x10] sm:$0xf]
    %v83 = vld [vmem:[#allocation6 + $0x14] sm:$0xf]
    %v84 = vld [vmem:[#allocation6 + $0x18] sm:$0xf]
    %v85 = vld [vmem:[#allocation6 + $0x1c] sm:$0xf]
    %v86 = vld [vmem:[#allocation6 + $0x20] sm:$0xf]
    %v87 = vld [vmem:[#allocation6 + $0x24] sm:$0xf]
    %v88 = vld [vmem:[#allocation6 + $0x28] sm:$0xf]
    %v89 = vld [vmem:[#allocation6 + $0x2c] sm:$0xf]
    %v90 = vld [vmem:[#allocation6 + $0x30] sm:$0xf]
    %v91 = vld [vmem:[#allocation6 + $0x34] sm:$0xf]
    %v92 = vld [vmem:[#allocation6 + $0x38] sm:$0xf]
    %v93 = vld [vmem:[#allocation6 + $0x3c] sm:$0xf]
    %v94 = vld [vmem:[#allocation6 + $0x40] sm:$0xf]
    %v95 = vld [vmem:[#allocation6 + $0x44] sm:$0xf]
    %v96 = vld [vmem:[#allocation6 + $0x48] sm:$0xf]
    %v97 = vld [vmem:[#allocation6 + $0x4c] sm:$0xf]
    %v98 = vld [vmem:[#allocation6 + $0x50] sm:$0xf]
    %v99 = vld [vmem:[#allocation6 + $0x54] sm:$0xf]
    %v100 = vld [vmem:[#allocation6 + $0x58] sm:$0xf]
    %v101 = vld [vmem:[#allocation6 + $0x5c] sm:$0xf]
    %v102 = vld [vmem:[#allocation6 + $0x60] sm:$0xf]
    %v103 = vld [vmem:[#allocation6 + $0x64] sm:$0xf]
    %v104 = vld [vmem:[#allocation6 + $0x68] sm:$0xf]
    %v105 = vld [vmem:[#allocation6 + $0x6c] sm:$0xf]
    %v106 = vld [vmem:[#allocation6 + $0x70] sm:$0xf]
    %v107 = vld [vmem:[#allocation6 + $0x74] sm:$0xf]
    %v108 = vld [vmem:[#allocation6 + $0x78] sm:$0xf]
    %v109 = vld [vmem:[#allocation6 + $0x7c] sm:$0xf]
    %v110 = vld [vmem:[#allocation6 + $0x80] sm:$0xf]
    %v111 = vld [vmem:[#allocation6 + $0x84] sm:$0xf]
    %v112 = vld [vmem:[#allocation6 + $0x88] sm:$0xf]
    %v113 = vld [vmem:[#allocation6 + $0x8c] sm:$0xf]
    %v114 = vld [vmem:[#allocation6 + $0x90] sm:$0xf]
    %v115 = vld [vmem:[#allocation6 + $0x94] sm:$0xf]
    %v116 = vld [vmem:[#allocation6 + $0x98] sm:$0xf]
    %v117 = vld [vmem:[#allocation6 + $0x9c] sm:$0xf]
    %v118 = vld [vmem:[#allocation6 + $0xa0] sm:$0xf]
    %v119 = vld [vmem:[#allocation6 + $0xa4] sm:$0xf]
    %v120 = vld [vmem:[#allocation6 + $0xa8] sm:$0xf]
    %v121 = vld [vmem:[#allocation6 + $0xac] sm:$0xf]
    %v122 = vld [vmem:[#allocation6 + $0xb0] sm:$0xf]
    %v123 = vld [vmem:[#allocation6 + $0xb4] sm:$0xf]
    %v124 = vld [vmem:[#allocation6 + $0xb8] sm:$0xf]
    %v125 = vld [vmem:[#allocation6 + $0xbc] sm:$0xf]
    %v126 = vld [vmem:[#allocation6 + $0xc0] sm:$0xf]
    %v127 = vld [vmem:[#allocation6 + $0xc4] sm:$0xf]
    %v128 = vld [vmem:[#allocation6 + $0xc8] sm:$0xf]
    %v129 = vld [vmem:[#allocation6 + $0xcc] sm:$0xf]
    %v130 = vld [vmem:[#allocation6 + $0xd0] sm:$0xf]
    %v131 = vld [vmem:[#allocation6 + $0xd4] sm:$0xf]
    %v132 = vld [vmem:[#allocation6 + $0xd8] sm:$0xf]
    %v133 = vld [vmem:[#allocation6 + $0xdc] sm:$0xf]
    %v134 = vld [vmem:[#allocation6 + $0xe0] sm:$0xf]
    %v135 = vld [vmem:[#allocation6 + $0xe4] sm:$0xf]
    %v136 = vld [vmem:[#allocation6 + $0xe8] sm:$0xf]
    %v137 = vld [vmem:[#allocation6 + $0xec] sm:$0xf]
    %v138 = vld [vmem:[#allocation6 + $0xf0] sm:$0xf]
    %v139 = vld [vmem:[#allocation6 + $0xf4] sm:$0xf]
    %v140 = vld [vmem:[#allocation6 + $0xf8] sm:$0xf]
    %v141 = vld [vmem:[#allocation6 + $0xfc] sm:$0xf]
    %v142 = vld [vmem:[#allocation6 + $0x100] sm:$0xf]
    %v143 = vld [vmem:[#allocation6 + $0x104] sm:$0xf]
    %v144 = vld [vmem:[#allocation6 + $0x108] sm:$0xf]
    %v145 = vld [vmem:[#allocation6 + $0x10c] sm:$0xf]
    %v146 = vld [vmem:[#allocation6 + $0x110] sm:$0xf]
    %v147 = vld [vmem:[#allocation6 + $0x114] sm:$0xf]
    %v148 = vld [vmem:[#allocation6 + $0x118] sm:$0xf]
    %v149 = vld [vmem:[#allocation6 + $0x11c] sm:$0xf]
    %v150 = vld [vmem:[#allocation6 + $0x120] sm:$0xf]
    %v151 = vld [vmem:[#allocation6 + $0x124] sm:$0xf]
    %v152 = vld [vmem:[#allocation6 + $0x128] sm:$0xf]
    %v153 = vld [vmem:[#allocation6 + $0x12c] sm:$0xf]
    %v154 = vld [vmem:[#allocation6 + $0x130] sm:$0xf]
    %v155 = vld [vmem:[#allocation6 + $0x134] sm:$0xf]
    %v156 = vld [vmem:[#allocation6 + $0x138] sm:$0xf]
    %v157 = vld [vmem:[#allocation6 + $0x13c] sm:$0xf]
    %v158 = vld [vmem:[#allocation6 + $0x140] sm:$0xf]
    %v159 = vld [vmem:[#allocation6 + $0x144] sm:$0xf]
    %v160 = vld [vmem:[#allocation6 + $0x148] sm:$0xf]
    %v161 = vld [vmem:[#allocation6 + $0x14c] sm:$0xf]
    %v162 = vld [vmem:[#allocation6 + $0x150] sm:$0xf]
    %v163 = vld [vmem:[#allocation6 + $0x154] sm:$0xf]
    %v164 = vld [vmem:[#allocation6 + $0x158] sm:$0xf]
    %v165 = vld [vmem:[#allocation6 + $0x15c] sm:$0xf]
    %v166 = vld [vmem:[#allocation6 + $0x160] sm:$0xf]
    %v167 = vld [vmem:[#allocation6 + $0x164] sm:$0xf]
    %v168 = vld [vmem:[#allocation6 + $0x168] sm:$0xf]
    %v169 = vld [vmem:[#allocation6 + $0x16c] sm:$0xf]
    %v170 = vld [vmem:[#allocation6 + $0x170] sm:$0xf]
    %v171 = vld [vmem:[#allocation6 + $0x174] sm:$0xf]
    %v172 = vld [vmem:[#allocation6 + $0x178] sm:$0xf]
    %v173 = vld [vmem:[#allocation6 + $0x17c] sm:$0xf]
    %v270 = vunpack.c.l.b16 %v78
    %v271 = vunpack.c.l.b16 %v79
    %v272 = vunpack.c.l.b16 %v80
    %v273 = vunpack.c.l.b16 %v81
    %v274 = vunpack.c.l.b16 %v82
    %v275 = vunpack.c.l.b16 %v83
    %v276 = vunpack.c.l.b16 %v84
    %v277 = vunpack.c.l.b16 %v85
    %v278 = vunpack.c.l.b16 %v86
    %v279 = vunpack.c.l.b16 %v87
    %v280 = vunpack.c.l.b16 %v88
    %v281 = vunpack.c.l.b16 %v89
    %v282 = vunpack.c.l.b16 %v90
    %v283 = vunpack.c.l.b16 %v91
    %v284 = vunpack.c.l.b16 %v92
    %v285 = vunpack.c.l.b16 %v93
    %v286 = vunpack.c.l.b16 %v94
    %v287 = vunpack.c.l.b16 %v95
    %v288 = vunpack.c.l.b16 %v96
    %v289 = vunpack.c.l.b16 %v97
    %v290 = vunpack.c.l.b16 %v98
    %v291 = vunpack.c.l.b16 %v99
    %v292 = vunpack.c.l.b16 %v100
    %v293 = vunpack.c.l.b16 %v101
    %v294 = vunpack.c.l.b16 %v102
    %v295 = vunpack.c.l.b16 %v103
    %v296 = vunpack.c.l.b16 %v104
    %v297 = vunpack.c.l.b16 %v105
    %v298 = vunpack.c.l.b16 %v106
    %v299 = vunpack.c.l.b16 %v107
    %v300 = vunpack.c.l.b16 %v108
    %v301 = vunpack.c.l.b16 %v109
    %v302 = vunpack.c.l.b16 %v110
    %v303 = vunpack.c.l.b16 %v111
    %v304 = vunpack.c.l.b16 %v112
    %v305 = vunpack.c.l.b16 %v113
    %v306 = vunpack.c.l.b16 %v114
    %v307 = vunpack.c.l.b16 %v115
    %v308 = vunpack.c.l.b16 %v116
    %v309 = vunpack.c.l.b16 %v117
    %v310 = vunpack.c.l.b16 %v118
    %v311 = vunpack.c.l.b16 %v119
    %v312 = vunpack.c.l.b16 %v120
    %v313 = vunpack.c.l.b16 %v121
    %v314 = vunpack.c.l.b16 %v122
    %v315 = vunpack.c.l.b16 %v123
    %v316 = vunpack.c.l.b16 %v124
    %v317 = vunpack.c.l.b16 %v125
    %v318 = vunpack.c.l.b16 %v126
    %v319 = vunpack.c.l.b16 %v127
    %v320 = vunpack.c.l.b16 %v128
    %v321 = vunpack.c.l.b16 %v129
    %v322 = vunpack.c.l.b16 %v130
    %v323 = vunpack.c.l.b16 %v131
    %v324 = vunpack.c.l.b16 %v132
    %v325 = vunpack.c.l.b16 %v133
    %v326 = vunpack.c.l.b16 %v134
    %v327 = vunpack.c.l.b16 %v135
    %v328 = vunpack.c.l.b16 %v136
    %v329 = vunpack.c.l.b16 %v137
    %v330 = vunpack.c.l.b16 %v138
    %v331 = vunpack.c.l.b16 %v139
    %v332 = vunpack.c.l.b16 %v140
    %v333 = vunpack.c.l.b16 %v141
    %v334 = vunpack.c.l.b16 %v142
    %v335 = vunpack.c.l.b16 %v143
    %v336 = vunpack.c.l.b16 %v144
    %v337 = vunpack.c.l.b16 %v145
    %v338 = vunpack.c.l.b16 %v146
    %v339 = vunpack.c.l.b16 %v147
    %v340 = vunpack.c.l.b16 %v148
    %v341 = vunpack.c.l.b16 %v149
    %v342 = vunpack.c.l.b16 %v150
    %v343 = vunpack.c.l.b16 %v151
    %v344 = vunpack.c.l.b16 %v152
    %v345 = vunpack.c.l.b16 %v153
    %v346 = vunpack.c.l.b16 %v154
    %v347 = vunpack.c.l.b16 %v155
    %v348 = vunpack.c.l.b16 %v156
    %v349 = vunpack.c.l.b16 %v157
    %v350 = vunpack.c.l.b16 %v158
    %v351 = vunpack.c.l.b16 %v159
    %v352 = vunpack.c.l.b16 %v160
    %v353 = vunpack.c.l.b16 %v161
    %v354 = vunpack.c.l.b16 %v162
    %v355 = vunpack.c.l.b16 %v163
    %v356 = vunpack.c.l.b16 %v164
    %v357 = vunpack.c.l.b16 %v165
    %v358 = vunpack.c.l.b16 %v166
    %v359 = vunpack.c.l.b16 %v167
    %v360 = vunpack.c.l.b16 %v168
    %v361 = vunpack.c.l.b16 %v169
    %v362 = vunpack.c.l.b16 %v170
    %v363 = vunpack.c.l.b16 %v171
    %v364 = vunpack.c.l.b16 %v172
    %v365 = vunpack.c.l.b16 %v173
    %v366 = vpack.c.b16 %v271, %v270
    %v367 = vpack.c.b16 %v273, %v272
    %v368 = vpack.c.b16 %v275, %v274
    %v369 = vpack.c.b16 %v277, %v276
    %v370 = vpack.c.b16 %v279, %v278
    %v371 = vpack.c.b16 %v281, %v280
    %v372 = vpack.c.b16 %v283, %v282
    %v373 = vpack.c.b16 %v285, %v284
    %v374 = vpack.c.b16 %v287, %v286
    %v375 = vpack.c.b16 %v289, %v288
    %v376 = vpack.c.b16 %v291, %v290
    %v377 = vpack.c.b16 %v293, %v292
    %v378 = vpack.c.b16 %v295, %v294
    %v379 = vpack.c.b16 %v297, %v296
    %v380 = vpack.c.b16 %v299, %v298
    %v381 = vpack.c.b16 %v301, %v300
    %v382 = vpack.c.b16 %v303, %v302
    %v383 = vpack.c.b16 %v305, %v304
    %v384 = vpack.c.b16 %v307, %v306
    %v385 = vpack.c.b16 %v309, %v308
    %v386 = vpack.c.b16 %v311, %v310
    %v387 = vpack.c.b16 %v313, %v312
    %v388 = vpack.c.b16 %v315, %v314
    %v389 = vpack.c.b16 %v317, %v316
    %v390 = vpack.c.b16 %v319, %v318
    %v391 = vpack.c.b16 %v321, %v320
    %v392 = vpack.c.b16 %v323, %v322
    %v393 = vpack.c.b16 %v325, %v324
    %v394 = vpack.c.b16 %v327, %v326
    %v395 = vpack.c.b16 %v329, %v328
    %v396 = vpack.c.b16 %v331, %v330
    %v397 = vpack.c.b16 %v333, %v332
    %v398 = vpack.c.b16 %v335, %v334
    %v399 = vpack.c.b16 %v337, %v336
    %v400 = vpack.c.b16 %v339, %v338
    %v401 = vpack.c.b16 %v341, %v340
    %v402 = vpack.c.b16 %v343, %v342
    %v403 = vpack.c.b16 %v345, %v344
    %v404 = vpack.c.b16 %v347, %v346
    %v405 = vpack.c.b16 %v349, %v348
    %v406 = vpack.c.b16 %v351, %v350
    %v407 = vpack.c.b16 %v353, %v352
    %v408 = vpack.c.b16 %v355, %v354
    %v409 = vpack.c.b16 %v357, %v356
    %v410 = vpack.c.b16 %v359, %v358
    %v411 = vpack.c.b16 %v361, %v360
    %v412 = vpack.c.b16 %v363, %v362
    %v413 = vpack.c.b16 %v365, %v364
    %462 = vmatpush.bf16.msra.mxu0 %v373
    %463 = vmatpush.bf16.msra.mxu0 %v372
    %464 = vmatpush.bf16.msra.mxu0 %v371
    %465 = vmatpush.bf16.msra.mxu0 %v370
    %466 = vmatpush.bf16.msra.mxu0 %v369
    %467 = vmatpush.bf16.msra.mxu0 %v368
    %468 = vmatpush.bf16.msra.mxu0 %v367
    %469 = vmatpush.bf16.msra.mxu0 %v366
    %470 = vmatmul.bf16.gmra.mxu0 %v72
    %v471 = vpop.f32.mrf.mxu0
    %v472 = vadd.f32 0.0, %v471
    %v473 = vpop.f32.mrf.mxu0
    %474 = vdwg.mxu0
    %475 = vmatpush.bf16.msra.mxu0 %v381
    %476 = vmatpush.bf16.msra.mxu0 %v380
    %477 = vmatpush.bf16.msra.mxu0 %v379
    %478 = vmatpush.bf16.msra.mxu0 %v378
    %479 = vmatpush.bf16.msra.mxu0 %v377
    %480 = vmatpush.bf16.msra.mxu0 %v376
    %481 = vmatpush.bf16.msra.mxu0 %v375
    %482 = vmatpush.bf16.msra.mxu0 %v374
    %483 = vmatmul.bf16.gmra.mxu0 %v73
    %v484 = vpop.f32.mrf.mxu0
    %v485 = vadd.f32 %v472, %v484
    %v486 = vpop.f32.mrf.mxu0
    %487 = vdwg.mxu0
    %488 = vmatpush.bf16.msra.mxu0 %v389
    %489 = vmatpush.bf16.msra.mxu0 %v388
    %490 = vmatpush.bf16.msra.mxu0 %v387
    %491 = vmatpush.bf16.msra.mxu0 %v386
    %492 = vmatpush.bf16.msra.mxu0 %v385
    %493 = vmatpush.bf16.msra.mxu0 %v384
    %494 = vmatpush.bf16.msra.mxu0 %v383
    %495 = vmatpush.bf16.msra.mxu0 %v382
    %496 = vmatmul.bf16.gmra.mxu0 %v74
    %v497 = vpop.f32.mrf.mxu0
    %v498 = vadd.f32 %v485, %v497
    %v499 = vpop.f32.mrf.mxu0
    %500 = vdwg.mxu0
    %501 = vmatpush.bf16.msra.mxu0 %v397
    %502 = vmatpush.bf16.msra.mxu0 %v396
    %503 = vmatpush.bf16.msra.mxu0 %v395
    %504 = vmatpush.bf16.msra.mxu0 %v394
    %505 = vmatpush.bf16.msra.mxu0 %v393
    %506 = vmatpush.bf16.msra.mxu0 %v392
    %507 = vmatpush.bf16.msra.mxu0 %v391
    %508 = vmatpush.bf16.msra.mxu0 %v390
    %509 = vmatmul.bf16.gmra.mxu0 %v75
    %v510 = vpop.f32.mrf.mxu0
    %v511 = vadd.f32 %v498, %v510
    %v512 = vpop.f32.mrf.mxu0
    %513 = vdwg.mxu0
    %514 = vmatpush.bf16.msra.mxu0 %v405
    %515 = vmatpush.bf16.msra.mxu0 %v404
    %516 = vmatpush.bf16.msra.mxu0 %v403
    %517 = vmatpush.bf16.msra.mxu0 %v402
    %518 = vmatpush.bf16.msra.mxu0 %v401
    %519 = vmatpush.bf16.msra.mxu0 %v400
    %520 = vmatpush.bf16.msra.mxu0 %v399
    %521 = vmatpush.bf16.msra.mxu0 %v398
    %522 = vmatmul.bf16.gmra.mxu0 %v76
    %v523 = vpop.f32.mrf.mxu0
    %v524 = vadd.f32 %v511, %v523
    %v525 = vpop.f32.mrf.mxu0
    %526 = vdwg.mxu0
    %527 = vmatpush.bf16.msra.mxu0 %v413
    %528 = vmatpush.bf16.msra.mxu0 %v412
    %529 = vmatpush.bf16.msra.mxu0 %v411
    %530 = vmatpush.bf16.msra.mxu0 %v410
    %531 = vmatpush.bf16.msra.mxu0 %v409
    %532 = vmatpush.bf16.msra.mxu0 %v408
    %533 = vmatpush.bf16.msra.mxu0 %v407
    %534 = vmatpush.bf16.msra.mxu0 %v406
    %535 = vmatmul.bf16.gmra.mxu0 %v77
    %v536 = vpop.f32.mrf.mxu0
    %v537 = vadd.f32 %v524, %v536
    %v538 = vpop.f32.mrf.mxu0
    %539 = vdwg.mxu0
    %540 = vst [vmem:[#allocation2] sm:$0xff] %v537
    %v541 = vld [vmem:[#allocation2] ss:$4 sm:$0x3]
    %s542 = scalar_lea.vmem [#allocation2], 1
    %v543 = vld [vmem:[%s542] ss:$4 sm:$0x3]
    %v544 = vadd.f32 %v541, %v543
    %s545 = scalar_lea.vmem [#allocation2], 2
    %v546 = vld [vmem:[%s545] ss:$4 sm:$0x3]
    %v547 = vadd.f32 %v544, %v546
    %s548 = scalar_lea.vmem [#allocation2], 3
    %v549 = vld [vmem:[%s548] ss:$4 sm:$0x3]
    %v550 = vadd.f32 %v547, %v549
    %v551 = vmul.f32 %v550, 0.25
    %v552 = vld [vmem:[%s2] sm:$0x1]
    %v554 = vperm.slane %v552, 0
    %v556 = vadd.f32 %v551, %v554
    %v557 = vld [vmem:[#allocation8] sm:$0xff]
    %v558 = vld [vmem:[#allocation8 + $0x8] sm:$0xff]
    %v559 = vld [vmem:[#allocation8 + $0x10] sm:$0xff]
    %v560 = vld [vmem:[#allocation8 + $0x18] sm:$0xff]
    %v561 = vld [vmem:[#allocation8 + $0x20] sm:$0xff]
    %v562 = vld [vmem:[#allocation8 + $0x28] sm:$0xff]
    %v563 = vld [vmem:[#allocation8 + $0x30] sm:$0xff]
    %v564 = vld [vmem:[#allocation8 + $0x38] sm:$0xff]
    %v565 = vld [vmem:[#allocation8 + $0x40] sm:$0xff]
    %v566 = vld [vmem:[#allocation8 + $0x48] sm:$0xff]
    %v567 = vld [vmem:[#allocation8 + $0x50] sm:$0xff]
    %v568 = vld [vmem:[#allocation8 + $0x58] sm:$0xff]
    %v569 = vld [vmem:[#allocation8 + $0x60] sm:$0xff]
    %v570 = vld [vmem:[#allocation8 + $0x68] sm:$0xff]
    %v571 = vld [vmem:[#allocation8 + $0x70] sm:$0xff]
    %v572 = vld [vmem:[#allocation8 + $0x78] sm:$0xff]
    %v573 = vld [vmem:[%s4] sm:$0x1]
    %v575 = vperm.slane %v573, 0
    %577 = vmatpush.msra.mxu0 %v572
    %578 = vmatpush.msra.mxu0 %v571
    %579 = vmatpush.msra.mxu0 %v570
    %580 = vmatpush.msra.mxu0 %v569
    %581 = vmatpush.msra.mxu0 %v568
    %582 = vmatpush.msra.mxu0 %v567
    %583 = vmatpush.msra.mxu0 %v566
    %584 = vmatpush.msra.mxu0 %v565
    %585 = vmatpush.msra.mxu0 %v564
    %586 = vmatpush.msra.mxu0 %v563
    %587 = vmatpush.msra.mxu0 %v562
    %588 = vmatpush.msra.mxu0 %v561
    %589 = vmatpush.msra.mxu0 %v560
    %590 = vmatpush.msra.mxu0 %v559
    %591 = vmatpush.msra.mxu0 %v558
    %592 = vmatpush.msra.mxu0 %v557
    %593 = vmatmul.f32.gmra.mxu0 %v556
    %v594 = vpop.f32.mrf.mxu0
    %v595 = vadd.f32 %v575, %v594
    %596 = vdwg.mxu0
    %597 = vst [vmem:[#allocation9] sm:$0x3] %v595
    // Predicated region
    $region34: #{tpu_custom_call.1} parent=1 // pred_check
      _
    $region35: #{tpu_custom_call.1} parent=1 // pred_check_branch
      %599 = sbr.rel (0) target = $region37
    $region36: #{tpu_custom_call.1} parent=1 // pred_region
      %601 = vsyncadd [#allocation5], 0
      %s603 = sshll.u32 [#allocation9], 4
      %s604 = int_to_ptr.vmem [resolvable:$true] %s603
      %s605 = sshll.u32 %s5, 4
      %s606 = int_to_ptr.hbm [resolvable:$true] %s605
      %608 = dma.vmem_to_hbm [thread:$0]  %s604, 32, %s606, [#allocation5]
    $region37: #{tpu_custom_call.1} parent=1 // pred_fallthru
      _
    // Predicated region
    $region38: #{tpu_custom_call.1} parent=1 // pred_check
      _
    $region39: #{tpu_custom_call.1} parent=1 // pred_check_branch
      %610 = sbr.rel (0) target = $region41
    $region40: #{tpu_custom_call.1} parent=1 // pred_region
      %612 = dma.done [#allocation5], 32
    $region41: #{tpu_custom_call.1} parent=1 // pred_fallthru
      _
    %613 = vsyncpa [#allocation4], 1
    %614 = vsyncpa [#allocation7], 1
    %615 = vsyncpa [#allocation5], 1

</llo_original>
